<compile_context>
chip_gen: v7x
topology: tpu7x:2x2x1
jax: 0.10.0
libtpu: 0.0.40
codegen_flags: <defaults>
</compile_context>

<pallas_src>
import functools

import jax
import jax.numpy as jnp
from jax.experimental import pallas as pl
from jax.experimental.pallas import tpu as pltpu

_LANES = 128
_SUBLANES = 8


def _round_up(x, m):
    return ((x + m - 1) // m) * m


def _cdiv(a, b):
    return -(-a // b)


def _disc_loss_kernel(x_ref, tw_ref, out_ref):
    """Accumulate sum(w * (x - t)^2) over the tile axis into an (8,128) block."""
    t = pl.program_id(1)

    @pl.when(t == 0)
    def _():
        out_ref[...] = jnp.zeros_like(out_ref)

    x = x_ref[...].astype(jnp.float32)      # (tile_rows, 128)
    tw = tw_ref[...]                        # (tile_rows, 2) f32
    tgt = tw[:, 0:1]                        # per-row target: 1.0 (real) / 0.0 (fake)
    w = tw[:, 1:2]                          # per-row weight: 1/N of owning pair (0 = pad)
    d = x - tgt
    contrib = w * (d * d)                   # (tile_rows, 128)
    # Fold row-groups of 8 into the native (8,128) tile: per-tile work is plain VPU
    # adds; the cross-lane/sublane reduce to a scalar happens once, in the wrapper.
    out_ref[...] += jnp.sum(contrib.reshape(-1, _SUBLANES, _LANES), axis=0)[None]


def _disc_loss_impl(real, gen, max_tile_rows):
    # Storage dtype of the data slab: keep bf16 (half the DMA bytes) iff every
    # input is bf16; otherwise widen to f32.
    dtypes = {x.dtype for x in (list(real) + list(gen))}
    slab_dtype = jnp.bfloat16 if dtypes == {jnp.dtype(jnp.bfloat16)} else jnp.float32
    row_align = 16 if slab_dtype == jnp.bfloat16 else _SUBLANES
    if max_tile_rows is None:
        max_tile_rows = 4096 if slab_dtype == jnp.bfloat16 else 2048

    x_blocks, tw_blocks = [], []
    total_rows = 0
    for dr, dg in zip(real, gen):
        for arr, target in ((dr, 1.0), (dg, 0.0)):
            flat = jnp.ravel(arr).astype(slab_dtype)
            n = flat.size
            rows = max(_cdiv(n, _LANES), 1)
            # Pad with the target value so padded lanes contribute exactly zero.
            flat = jnp.pad(flat, (0, rows * _LANES - n), constant_values=target)
            x_blocks.append(flat.reshape(rows, _LANES))
            tw_blocks.append(
                jnp.concatenate(
                    [jnp.full((rows, 1), target, jnp.float32),
                     jnp.full((rows, 1), 1.0 / n, jnp.float32)], axis=1))
            total_rows += rows

    tile_rows = min(_round_up(max_tile_rows, row_align),
                    _round_up(total_rows, row_align))
    num_tiles = _cdiv(total_rows, tile_rows)
    # Split the row range across both TensorCores (v7x); on single-TC chips the
    # leading "parallel" axis just iterates sequentially at negligible cost.
    num_cores = 2 if num_tiles >= 2 else 1
    tiles_per_core = _cdiv(num_tiles, num_cores)
    padded_rows = num_cores * tiles_per_core * tile_rows

    pad_rows = padded_rows - total_rows
    if pad_rows:
        # Global padding rows: x = 0, target = 0, weight = 0 -> contribute nothing.
        x_blocks.append(jnp.zeros((pad_rows, _LANES), slab_dtype))
        tw_blocks.append(jnp.zeros((pad_rows, 2), jnp.float32))

    x_slab = jnp.concatenate(x_blocks, axis=0)      # (padded_rows, 128)
    tw_slab = jnp.concatenate(tw_blocks, axis=0)    # (padded_rows, 2)

    out = pl.pallas_call(
        _disc_loss_kernel,
        out_shape=jax.ShapeDtypeStruct((num_cores, _SUBLANES, _LANES), jnp.float32),
        grid=(num_cores, tiles_per_core),
        in_specs=[
            pl.BlockSpec((tile_rows, _LANES),
                         lambda c, t: (c * tiles_per_core + t, 0)),
            pl.BlockSpec((tile_rows, 2),
                         lambda c, t: (c * tiles_per_core + t, 0)),
        ],
        out_specs=pl.BlockSpec((1, _SUBLANES, _LANES), lambda c, t: (c, 0, 0)),
        compiler_params=pltpu.CompilerParams(
            dimension_semantics=("parallel", "arbitrary"),
            allow_input_fusion=[True, True]),
    )(x_slab, tw_slab)

    # One small tree reduce outside the kernel (also sums the per-core partials).
    return jnp.sum(out)


@functools.partial(jax.custom_vjp, nondiff_argnums=(2,))
def _disc_loss(real, gen, max_tile_rows):
    return _disc_loss_impl(real, gen, max_tile_rows)


def _disc_loss_fwd(real, gen, max_tile_rows):
    return _disc_loss_impl(real, gen, max_tile_rows), (real, gen)


def _disc_loss_bwd(max_tile_rows, residuals, ct):
    real, gen = residuals
    ct = jnp.asarray(ct, jnp.float32)
    d_real = tuple(
        (ct * (2.0 / dr.size) * (dr.astype(jnp.float32) - 1.0)).astype(dr.dtype)
        for dr in real)
    d_gen = tuple(
        (ct * (2.0 / dg.size) * dg.astype(jnp.float32)).astype(dg.dtype)
        for dg in gen)
    return d_real, d_gen


_disc_loss.defvjp(_disc_loss_fwd, _disc_loss_bwd)


def discriminator_loss(real_outputs, generated_outputs, *, max_tile_rows=None):
    """Pallas TPU implementation of DiscriminatorLoss.forward (differentiable)."""
    real = tuple(jnp.asarray(x) for x in real_outputs)
    gen = tuple(jnp.asarray(x) for x in generated_outputs)
    assert len(real) == len(gen)
    if not real:
        return jnp.float32(0.0)
    return _disc_loss(real, gen, max_tile_rows)


def _reference_loss(real_outputs, generated_outputs):
    loss = jnp.float32(0.0)
    for dr, dg in zip(real_outputs, generated_outputs):
        dr = jnp.asarray(dr, jnp.float32)
        dg = jnp.asarray(dg, jnp.float32)
        loss = loss + jnp.mean((dr - 1.0) ** 2) + jnp.mean(dg ** 2)
    return loss


if __name__ == "__main__":
    key = jax.random.PRNGKey(0)
    # Small shapes mimicking multi-scale / multi-period discriminator outputs.
    shapes = [(2, 1, 64), (2, 1, 128), (2, 4, 32), (2, 4, 256)]
    keys = jax.random.split(key, 2 * len(shapes))
    real_outputs = [
        jax.random.normal(keys[2 * i], s, dtype=jnp.float32) for i, s in enumerate(shapes)
    ]
    generated_outputs = [
        jax.random.normal(keys[2 * i + 1], s, dtype=jnp.float32) for i, s in enumerate(shapes)
    ]

    ref = jax.block_until_ready(_reference_loss(real_outputs, generated_outputs))

    # Default tiling (single tile covers these small inputs).
    loss = jax.block_until_ready(discriminator_loss(real_outputs, generated_outputs))
    assert jnp.allclose(loss, ref, rtol=1e-5, atol=1e-5), (loss, ref)

    # Small tile size: exercises the multi-tile accumulation path and the
    # dual-TensorCore ("parallel") split with per-core partial outputs.
    loss_tiled = jax.block_until_ready(
        discriminator_loss(real_outputs, generated_outputs, max_tile_rows=8))
    assert jnp.allclose(loss_tiled, ref, rtol=1e-5, atol=1e-5), (loss_tiled, ref)

    # bf16 storage path (16-row sublane alignment, bf16 kept in HBM).
    real_bf16 = [x.astype(jnp.bfloat16) for x in real_outputs]
    gen_bf16 = [x.astype(jnp.bfloat16) for x in generated_outputs]
    ref_bf16 = jax.block_until_ready(_reference_loss(real_bf16, gen_bf16))
    loss_bf16 = jax.block_until_ready(
        discriminator_loss(real_bf16, gen_bf16, max_tile_rows=8))
    assert jnp.allclose(loss_bf16, ref_bf16, rtol=1e-5, atol=1e-5), (loss_bf16, ref_bf16)

    # Gradient path (custom_vjp) against autodiff of the pure-JAX reference.
    gr, gg = jax.grad(discriminator_loss, argnums=(0, 1))(real_outputs, generated_outputs)
    gr_ref, gg_ref = jax.grad(_reference_loss, argnums=(0, 1))(real_outputs, generated_outputs)
    for a, b in zip(list(gr) + list(gg), list(gr_ref) + list(gg_ref)):
        assert jnp.allclose(a, b, rtol=1e-5, atol=1e-6)

    print("KERNEL_OK")
</pallas_src>

<mosaic_0001>
module attributes {stable_mosaic.version = 11 : i64} {
  func.func @_disc_loss_kernel(%arg0: i32, %arg1: i32, %arg2: memref<48x128xf32, #tpu.memory_space<vmem>>, %arg3: memref<48x2xf32, #tpu.memory_space<vmem>>, %arg4: memref<1x8x128xf32, #tpu.memory_space<vmem>>) attributes {dimension_semantics = [#tpu.dimension_semantics<parallel>, #tpu.dimension_semantics<arbitrary>], iteration_bounds = array<i64: 1, 1>, scalar_prefetch = 0 : i64, scratch_operands = 0 : i64, tpu.core_type = #tpu.core_type<tc>, window_params = [{transform_indices = @transform_0, window_bounds = array<i64: 48, 128>}, {transform_indices = @transform_1, window_bounds = array<i64: 48, 2>}, {transform_indices = @transform_2, window_bounds = array<i64: 1, 8, 128>}]} {
    %c0_i32 = arith.constant 0 : i32
    %0 = arith.cmpi eq, %arg1, %c0_i32 : i32
    %1 = arith.extui %0 : i1 to i32
    %c0_i32_0 = arith.constant 0 : i32
    %2 = arith.cmpi ne, %1, %c0_i32_0 : i32
    scf.if %2 {
      %cst_10 = arith.constant 0.000000e+00 : f32
      %18 = vector.broadcast %cst_10 : f32 to vector<1x8x128xf32>
      %c0_11 = arith.constant 0 : index
      %c0_12 = arith.constant 0 : index
      %c0_13 = arith.constant 0 : index
      %19 = vector.load %arg4[%c0_11, %c0_12, %c0_13] : memref<1x8x128xf32, #tpu.memory_space<vmem>>, vector<1x8x128xf32>
      tpu.vector_store %arg4[%c0_11, %c0_12, %c0_13], %18 {strides = array<i32>} : memref<1x8x128xf32, #tpu.memory_space<vmem>>, vector<1x8x128xf32>,
    } else {
    }
    %c0 = arith.constant 0 : index
    %c0_1 = arith.constant 0 : index
    %3 = vector.load %arg2[%c0, %c0_1] : memref<48x128xf32, #tpu.memory_space<vmem>>, vector<48x128xf32>
    %c0_2 = arith.constant 0 : index
    %c0_3 = arith.constant 0 : index
    %4 = vector.load %arg3[%c0_2, %c0_3] : memref<48x2xf32, #tpu.memory_space<vmem>>, vector<48x2xf32>
    %5 = vector.extract_strided_slice %4 {offsets = [0, 0], sizes = [48, 1], strides = [1, 1]} : vector<48x2xf32> to vector<48x1xf32>
    %6 = vector.extract_strided_slice %4 {offsets = [0, 1], sizes = [48, 1], strides = [1, 1]} : vector<48x2xf32> to vector<48x1xf32>
    %7 = vector.broadcast %5 : vector<48x1xf32> to vector<48x128xf32>
    %8 = arith.subf %3, %7 : vector<48x128xf32>
    %9 = arith.mulf %8, %8 : vector<48x128xf32>
    %10 = vector.broadcast %6 : vector<48x1xf32> to vector<48x128xf32>
    %11 = arith.mulf %10, %9 : vector<48x128xf32>
    %c0_4 = arith.constant 0 : index
    %c0_5 = arith.constant 0 : index
    %c0_6 = arith.constant 0 : index
    %12 = vector.load %arg4[%c0_4, %c0_5, %c0_6] : memref<1x8x128xf32, #tpu.memory_space<vmem>>, vector<1x8x128xf32>
    %13 = vector.shape_cast %11 : vector<48x128xf32> to vector<6x8x128xf32>
    %cst = arith.constant dense<0.000000e+00> : vector<8x128xf32>
    %14 = vector.multi_reduction <add>, %13, %cst [0] : vector<6x8x128xf32> to vector<8x128xf32>
    %15 = vector.shape_cast %14 : vector<8x128xf32> to vector<1x8x128xf32>
    %16 = arith.addf %12, %15 : vector<1x8x128xf32>
    %c0_7 = arith.constant 0 : index
    %c0_8 = arith.constant 0 : index
    %c0_9 = arith.constant 0 : index
    %17 = vector.load %arg4[%c0_7, %c0_8, %c0_9] : memref<1x8x128xf32, #tpu.memory_space<vmem>>, vector<1x8x128xf32>
    tpu.vector_store %arg4[%c0_7, %c0_8, %c0_9], %16 {strides = array<i32>} : memref<1x8x128xf32, #tpu.memory_space<vmem>>, vector<1x8x128xf32>,
    return
  }
  func.func @transform_0(%arg0: i32, %arg1: i32) -> (i32, i32) {
    %c1_i32 = arith.constant 1 : i32
    %0 = arith.muli %arg0, %c1_i32 : i32
    %1 = arith.addi %0, %arg1 : i32
    %c0_i32 = arith.constant 0 : i32
    %c0_i32_0 = arith.constant 0 : i32
    return %1, %c0_i32 : i32, i32
  }
  func.func @transform_1(%arg0: i32, %arg1: i32) -> (i32, i32) {
    %c1_i32 = arith.constant 1 : i32
    %0 = arith.muli %arg0, %c1_i32 : i32
    %1 = arith.addi %0, %arg1 : i32
    %c0_i32 = arith.constant 0 : i32
    %c0_i32_0 = arith.constant 0 : i32
    return %1, %c0_i32 : i32, i32
  }
  func.func @transform_2(%arg0: i32, %arg1: i32) -> (i32, i32, i32) {
    %c0_i32 = arith.constant 0 : i32
    %c0_i32_0 = arith.constant 0 : i32
    %c0_i32_1 = arith.constant 0 : i32
    return %arg0, %c0_i32, %c0_i32_0 : i32, i32, i32
  }
}

</mosaic_0001>

<llo_original>
// kernel: tpu_custom_call.1
$region0: #{tpu_custom_call.1}
  #allocation0 [shape = 'u32[]', space=smem, size = 0x4, offset = 0x4, fixed_abs, tag = 'smem constant byte address 0x4 - core index']
  #allocation1 [shape = 'u32[144,128]{1,0:T(1,128)}', space=vmem, size = 0x12000, scoped, tag = 'internal scratch']
  %s0 = inlined_call_operand.vmem [shape: f32[48,128], index: 0, kind: input, shape index: {}]
  %s1 = inlined_call_operand.vmem [shape: f32[48,2], index: 1, kind: input, shape index: {}]
  %s2 = inlined_call_operand.hbm [shape: f32[1,8,128], index: 2, kind: output, shape index: {}]
  %s3 = sld [smem:[#allocation0]]
  $region22: #{tpu_custom_call.1} parent=0
    _
  %s5 = ssub.s32 1, %s3
  %s6 = scalar_select 0, %s5, %s3
  $region1: #{tpu_custom_call.1} parent=0
    #allocation2 [shape = 'u8[4096]{0}', space=vmem, size = 0x1000, scoped, tag = 'output window, operand 0, single buffered']
    #allocation3 [shape = 's32[1]{0}', space=sflag, size = 0x4, scoped, tag = 'scoped memory for tpu_custom_call.1']
    %7 = vsyncpa [#allocation3], 0
    // Predicated region
    $region2: #{tpu_custom_call.1} parent=1 // pred_check
      _
    $region3: #{tpu_custom_call.1} parent=1 // pred_check_branch
      %9 = sbr.rel (0) target = $region5
    $region4: #{tpu_custom_call.1} parent=1 // pred_region
      %s10 = sadd.s32 0, 0
      %s11 = smul.u32 6, %s10
      %p12 = scmp.lt.s32.totalorder %s11, 5
      %s13 = scalar_select %p12, %s11, 5
      %s14 = smul.addr %s13, 8
      %s15 = scalar_lea.vmem %s0, %s14
      %s16 = sadd.s32 0, 0
      %s17 = smul.u32 6, %s16
    $region5: #{tpu_custom_call.1} parent=1 // pred_fallthru
      _
    // Predicated region
    $region6: #{tpu_custom_call.1} parent=1 // pred_check
      _
    $region7: #{tpu_custom_call.1} parent=1 // pred_check_branch
      %19 = sbr.rel (0) target = $region9
    $region8: #{tpu_custom_call.1} parent=1 // pred_region
      %s20 = sadd.s32 0, 0
      %s21 = smul.u32 6, %s20
      %p22 = scmp.lt.s32.totalorder %s21, 5
      %s23 = scalar_select %p22, %s21, 5
      %s24 = smul.addr %s23, 8
      %s25 = scalar_lea.vmem %s1, %s24
      %s26 = sadd.s32 0, 0
      %s27 = smul.u32 6, %s26
    $region9: #{tpu_custom_call.1} parent=1 // pred_fallthru
      _
    %s28 = sadd.s32 0, 0
    %s29 = smul.u32 6, %s28
    %p30 = scmp.lt.s32.totalorder %s29, 5
    %s31 = scalar_select %p30, %s29, 5
    %s32 = smul.addr %s31, 8
    %s33 = scalar_lea.vmem %s0, %s32
    %s34 = sadd.s32 0, 0
    %s35 = smul.u32 6, %s34
    %p36 = scmp.lt.s32.totalorder %s35, 5
    %s37 = scalar_select %p36, %s35, 5
    %s38 = smul.addr %s37, 8
    %s39 = scalar_lea.vmem %s1, %s38
    %s40 = sadd.s32 0, 0
    %s41 = smul.u32 6, %s40
    %p42 = scmp.lt.s32.totalorder %s41, 5
    %s43 = scalar_select %p42, %s41, 5
    %s44 = smul.addr %s43, 8
    %s45 = scalar_lea.vmem %s0, %s44
    %s46 = sadd.s32 0, 0
    %s47 = smul.u32 6, %s46
    %s48 = sadd.s32 0, 0
    %s49 = smul.u32 6, %s48
    %p50 = scmp.lt.s32.totalorder %s49, 5
    %s51 = scalar_select %p50, %s49, 5
    %s52 = smul.addr %s51, 8
    %s53 = scalar_lea.vmem %s1, %s52
    %s54 = sadd.s32 0, 0
    %s55 = smul.u32 6, %s54
    %p56 = scmp.eq.s32.totalorder 0, 0
    // Predicated region
    $region10: #{tpu_custom_call.1} parent=1 // pred_check
      %p57 = pneg %p56
    $region11: #{tpu_custom_call.1} parent=1 // pred_check_branch
      %59 = sbr.rel (%p57) target = $region13
    $region12: #{tpu_custom_call.1} parent=1 // pred_region
      %60 = vst [vmem:[#allocation2] sm:$0xff] 0.0
    $region13: #{tpu_custom_call.1} parent=1 // pred_fallthru
      _
    %v61 = vld [vmem:[%s45] sm:$0xff]
    %v62 = vld [vmem:[%s45 + $0x8] sm:$0xff]
    %v63 = vld [vmem:[%s45 + $0x10] sm:$0xff]
    %v64 = vld [vmem:[%s45 + $0x18] sm:$0xff]
    %v65 = vld [vmem:[%s45 + $0x20] sm:$0xff]
    %v66 = vld [vmem:[%s45 + $0x28] sm:$0xff]
    %v67 = vld [vmem:[%s53] sm:$0xff]
    %v68 = vld [vmem:[%s53 + $0x8] sm:$0xff]
    %v69 = vld [vmem:[%s53 + $0x10] sm:$0xff]
    %v70 = vld [vmem:[%s53 + $0x18] sm:$0xff]
    %v71 = vld [vmem:[%s53 + $0x20] sm:$0xff]
    %v72 = vld [vmem:[%s53 + $0x28] sm:$0xff]
    %74 = vset.pattern.permute.xlu0 0
    %75 = vperm.xlu0 %74, %v67
    %v76 = vpop.permute.xlu0 %75
    %79 = vset.pattern.permute.xlu0 0
    %80 = vperm.xlu0 %79, %v68
    %v81 = vpop.permute.xlu0 %80
    %84 = vset.pattern.permute.xlu0 0
    %85 = vperm.xlu0 %84, %v69
    %v86 = vpop.permute.xlu0 %85
    %89 = vset.pattern.permute.xlu0 0
    %90 = vperm.xlu0 %89, %v70
    %v91 = vpop.permute.xlu0 %90
    %94 = vset.pattern.permute.xlu0 0
    %95 = vperm.xlu0 %94, %v71
    %v96 = vpop.permute.xlu0 %95
    %99 = vset.pattern.permute.xlu0 0
    %100 = vperm.xlu0 %99, %v72
    %v101 = vpop.permute.xlu0 %100
    %v103 = vsub.f32 %v61, %v76
    %v104 = vsub.f32 %v62, %v81
    %v105 = vsub.f32 %v63, %v86
    %v106 = vsub.f32 %v64, %v91
    %v107 = vsub.f32 %v65, %v96
    %v108 = vsub.f32 %v66, %v101
    %v109 = vmul.f32 %v103, %v103
    %v110 = vmul.f32 %v104, %v104
    %v111 = vmul.f32 %v105, %v105
    %v112 = vmul.f32 %v106, %v106
    %v113 = vmul.f32 %v107, %v107
    %v114 = vmul.f32 %v108, %v108
    %115 = vset.pattern.permute.xlu0 1
    %116 = vperm.xlu0 %115, %v67
    %v117 = vpop.permute.xlu0 %116
    %119 = vset.pattern.permute.xlu0 1
    %120 = vperm.xlu0 %119, %v68
    %v121 = vpop.permute.xlu0 %120
    %123 = vset.pattern.permute.xlu0 1
    %124 = vperm.xlu0 %123, %v69
    %v125 = vpop.permute.xlu0 %124
    %127 = vset.pattern.permute.xlu0 1
    %128 = vperm.xlu0 %127, %v70
    %v129 = vpop.permute.xlu0 %128
    %131 = vset.pattern.permute.xlu0 1
    %132 = vperm.xlu0 %131, %v71
    %v133 = vpop.permute.xlu0 %132
    %135 = vset.pattern.permute.xlu0 1
    %136 = vperm.xlu0 %135, %v72
    %v137 = vpop.permute.xlu0 %136
    %v139 = vmul.f32 %v117, %v109
    %v140 = vmul.f32 %v121, %v110
    %v141 = vmul.f32 %v125, %v111
    %v142 = vmul.f32 %v129, %v112
    %v143 = vmul.f32 %v133, %v113
    %v144 = vmul.f32 %v137, %v114
    %v145 = vld [vmem:[#allocation2] sm:$0xff]
    %v146 = vadd.f32 %v139, %v140
    %v147 = vadd.f32 %v146, %v141
    %v148 = vadd.f32 %v147, %v142
    %v149 = vadd.f32 %v148, %v143
    %v150 = vadd.f32 %v149, %v144
    %v151 = vadd.f32 %v145, %v150
    %152 = vst [vmem:[#allocation2] sm:$0xff] %v151
    // Predicated region
    $region14: #{tpu_custom_call.1} parent=1 // pred_check
      _
    $region15: #{tpu_custom_call.1} parent=1 // pred_check_branch
      %154 = sbr.rel (0) target = $region17
    $region16: #{tpu_custom_call.1} parent=1 // pred_region
      %s156 = ssub.s32 128, 128
      %157 = vsyncadd [#allocation3], %s156
      %s159 = sshll.u32 [#allocation2], 4
      %s160 = int_to_ptr.vmem [resolvable:$true] %s159
      %162 = dma.vmem_to_hbm [thread:$0]  %s160, 128, %s2, [#allocation3]
    $region17: #{tpu_custom_call.1} parent=1 // pred_fallthru
      _
    // Predicated region
    $region18: #{tpu_custom_call.1} parent=1 // pred_check
      _
    $region19: #{tpu_custom_call.1} parent=1 // pred_check_branch
      %164 = sbr.rel (0) target = $region21
    $region20: #{tpu_custom_call.1} parent=1 // pred_region
      %165 = dma.done [#allocation3], 128
    $region21: #{tpu_custom_call.1} parent=1 // pred_fallthru
      _
    %166 = vsyncpa [#allocation3], 1

</llo_original>
